<compile_context>
chip_gen: v7x
topology: tpu7x:2x2x1
jax: 0.10.0
libtpu: 0.0.40
codegen_flags: <defaults>
</compile_context>

<pallas_src>
import math

import jax
import jax.numpy as jnp
from jax.experimental import pallas as pl
from jax.experimental.pallas import tpu as pltpu

_C1 = math.sqrt(2.0 / math.pi)
_C2 = math.sqrt(2.0 / math.pi) * 0.044715


def _bias_new_gelu_kernel(x_ref, b_ref, o_ref):
    # x_ref: (r_tile, h_tile), b_ref: (1, h_tile)
    x = x_ref[...].astype(jnp.float32)
    b = b_ref[...].astype(jnp.float32)
    u = x + b                                  # bias broadcast over rows
    inner = u * (_C1 + _C2 * (u * u))          # constants folded: 3 mul + 1 add
    th = jnp.tanh(inner)                       # EUP slot (free relative to VALU)
    o_ref[...] = (u * (0.5 + 0.5 * th)).astype(o_ref.dtype)


def _round_up(v, m):
    return ((v + m - 1) // m) * m


def _vmem_capacity_bytes():
    try:
        return int(pltpu.get_tpu_info().vmem_capacity_bytes)
    except Exception:
        return 64 << 20  # conservative fallback (v7x per-TensorCore VMEM)


def fused_bias_new_gelu(x, bias, *, target_block_bytes=None):
    """x: (..., hidden), bias: (hidden,) -> same shape/dtype as x."""
    orig_shape = x.shape
    hidden = orig_shape[-1]
    assert bias.shape == (hidden,), f"bias shape {bias.shape} != ({hidden},)"

    dtype_bytes = jnp.dtype(x.dtype).itemsize
    bias_bytes = jnp.dtype(bias.dtype).itemsize
    # Sublane packing: 8 rows for 4-byte, 16 for 2-byte, 32 for 1-byte dtypes.
    sub = max(8, 32 // max(1, dtype_bytes))

    vmem_cap = _vmem_capacity_bytes()
    if target_block_bytes is None:
        # ~12 MiB blocks on 128 MiB VMEM (v5e/v6e), ~8 MiB on 64 MiB VMEM (v7x):
        # 4 * block (double-buffered in+out) stays <= ~50% of physical VMEM.
        target_block_bytes = (12 << 20) if vmem_cap >= (96 << 20) else (8 << 20)

    x2d = x.reshape(-1, hidden)
    rows = x2d.shape[0]
    bias_row = bias

    # --- Lane-dense plumbing: if hidden is not a multiple of 128, fold rows
    # into the lane dimension so stores are unmasked full-lane `vst`.
    if hidden % 128 != 0:
        k = 128 // math.gcd(hidden, 128)  # smallest k with k*hidden % 128 == 0
        if k > 1 and rows % k == 0:
            x2d = x2d.reshape(rows // k, k * hidden)
            bias_row = jnp.tile(bias, k)
            rows, hidden = x2d.shape
        # else: fall back to full-extent last dim (correct, lane-masked stores).
    bias2d = bias_row.reshape(1, hidden)

    # --- Hidden tile: keep full hidden unless even a single sublane-row of it
    # exceeds the byte budget; then the largest 128-multiple divisor of hidden.
    h_tile = hidden
    if hidden % 128 == 0 and hidden * dtype_bytes * sub > target_block_bytes:
        max_tile = max(128, (target_block_bytes // (dtype_bytes * sub)) // 128 * 128)
        h_tile = 128
        for cand in range(max_tile, 127, -128):
            if hidden % cand == 0:
                h_tile = cand
                break

    # --- Row tile sized by bytes, multiple of the sublane pack.
    rows_per_block = max(1, target_block_bytes // max(1, h_tile * dtype_bytes))
    if rows <= sub:
        r_tile = rows  # exact (== full array dim), no masked padding
    else:
        r_tile = max(sub, (rows_per_block // sub) * sub)
        r_tile = min(r_tile, _round_up(rows, sub))
        # Keep >= 2 grid steps when possible so the two v7x TensorCores both get
        # work (costs only ~0.35 us extra per step on single-TC chips).
        if pl.cdiv(hidden, h_tile) * pl.cdiv(rows, r_tile) < 2:
            r_tile = max(sub, _round_up(pl.cdiv(rows, 2), sub))

    n_h = pl.cdiv(hidden, h_tile)
    n_r = pl.cdiv(rows, r_tile)
    # Hidden as the OUTER (slow) grid axis: the bias block index is constant
    # across the inner row sweep so its DMA is not re-issued every step.
    grid = (n_h, n_r)

    block_bytes = r_tile * h_tile * dtype_bytes
    # Double-buffered in + out blocks, bias row, plus slack for Mosaic internal
    # scratch and f32 upcast temporaries of sub-32-bit inputs.
    vmem_limit = int(4 * block_bytes + 4 * h_tile * bias_bytes + (4 << 20))
    vmem_limit = min(vmem_limit, int(0.9 * vmem_cap))

    n_elems = rows * hidden
    cost = pl.CostEstimate(
        flops=8 * n_elems,
        transcendentals=n_elems,
        bytes_accessed=2 * n_elems * dtype_bytes + hidden * bias_bytes,
    )

    out = pl.pallas_call(
        _bias_new_gelu_kernel,
        out_shape=jax.ShapeDtypeStruct((rows, hidden), x.dtype),
        grid_spec=pltpu.PrefetchScalarGridSpec(
            num_scalar_prefetch=0,
            grid=grid,
            in_specs=[
                pl.BlockSpec((r_tile, h_tile), lambda j, i: (i, j)),
                pl.BlockSpec((1, h_tile), lambda j, i: (0, j)),
            ],
            out_specs=pl.BlockSpec((r_tile, h_tile), lambda j, i: (i, j)),
        ),
        compiler_params=pltpu.CompilerParams(
            dimension_semantics=("parallel", "parallel"),
            vmem_limit_bytes=vmem_limit,
        ),
        cost_estimate=cost,
    )(x2d, bias2d)

    return out.reshape(orig_shape)


def _reference(x, bias):
    u = x.astype(jnp.float32) + bias.astype(jnp.float32)
    y = 0.5 * u * (1.0 + jnp.tanh(_C1 * (u + 0.044715 * jnp.power(u, 3.0))))
    return y.astype(x.dtype)


if __name__ == "__main__":
    key = jax.random.PRNGKey(0)
    kx, kb, kx2, kb2 = jax.random.split(key, 4)

    # Small shape consistent with the module: (batch, seq, hidden) + bias(hidden).
    batch, seq, hidden = 2, 8, 32
    x = jax.random.normal(kx, (batch, seq, hidden), dtype=jnp.float32)
    # Module init: torch.nn.init.uniform_(bias, 0, 1) when prev_weight is None.
    bias = jax.random.uniform(kb, (hidden,), dtype=jnp.float32, minval=0.0, maxval=1.0)

    y = jax.block_until_ready(fused_bias_new_gelu(x, bias))
    y_ref = _reference(x, bias)
    assert y.shape == x.shape and y.dtype == x.dtype
    assert jnp.allclose(y, y_ref, atol=1e-5, rtol=1e-5), "mismatch vs reference (folded path)"

    # Exercise the 128-multiple (non-folded) path too.
    hidden2 = 256
    x2 = jax.random.normal(kx2, (batch, 16, hidden2), dtype=jnp.float32)
    bias2 = jax.random.uniform(kb2, (hidden2,), dtype=jnp.float32, minval=0.0, maxval=1.0)
    y2 = jax.block_until_ready(fused_bias_new_gelu(x2, bias2))
    assert jnp.allclose(y2, _reference(x2, bias2), atol=1e-5, rtol=1e-5), "mismatch (dense path)"

    print("KERNEL_OK")
</pallas_src>

<mosaic_0001>
module attributes {stable_mosaic.version = 11 : i64} {
  func.func @_bias_new_gelu_kernel(%arg0: i32, %arg1: i32, %arg2: memref<4x128xf32, #tpu.memory_space<vmem>>, %arg3: memref<1x128xf32, #tpu.memory_space<vmem>>, %arg4: memref<4x128xf32, #tpu.memory_space<vmem>>) attributes {dimension_semantics = [#tpu.dimension_semantics<parallel>, #tpu.dimension_semantics<parallel>], iteration_bounds = array<i64: 1, 1>, scalar_prefetch = 0 : i64, scratch_operands = 0 : i64, tpu.core_type = #tpu.core_type<tc>, window_params = [{transform_indices = @transform_0, window_bounds = array<i64: 4, 128>}, {transform_indices = @transform_1, window_bounds = array<i64: 1, 128>}, {transform_indices = @transform_2, window_bounds = array<i64: 4, 128>}]} {
    %c0 = arith.constant 0 : index
    %c0_0 = arith.constant 0 : index
    %0 = vector.load %arg2[%c0, %c0_0] : memref<4x128xf32, #tpu.memory_space<vmem>>, vector<4x128xf32>
    %c0_1 = arith.constant 0 : index
    %c0_2 = arith.constant 0 : index
    %1 = vector.load %arg3[%c0_1, %c0_2] : memref<1x128xf32, #tpu.memory_space<vmem>>, vector<1x128xf32>
    %2 = vector.broadcast %1 : vector<1x128xf32> to vector<4x128xf32>
    %3 = arith.addf %0, %2 : vector<4x128xf32>
    %4 = arith.mulf %3, %3 : vector<4x128xf32>
    %cst = arith.constant 0.0356774069 : f32
    %5 = vector.broadcast %cst : f32 to vector<4x128xf32>
    %6 = arith.mulf %5, %4 : vector<4x128xf32>
    %cst_3 = arith.constant 0.797884583 : f32
    %7 = vector.broadcast %cst_3 : f32 to vector<4x128xf32>
    %8 = arith.addf %7, %6 : vector<4x128xf32>
    %9 = arith.mulf %3, %8 : vector<4x128xf32>
    %10 = math.tanh %9 : vector<4x128xf32>
    %cst_4 = arith.constant 5.000000e-01 : f32
    %11 = vector.broadcast %cst_4 : f32 to vector<4x128xf32>
    %12 = arith.mulf %11, %10 : vector<4x128xf32>
    %cst_5 = arith.constant 5.000000e-01 : f32
    %13 = vector.broadcast %cst_5 : f32 to vector<4x128xf32>
    %14 = arith.addf %13, %12 : vector<4x128xf32>
    %15 = arith.mulf %3, %14 : vector<4x128xf32>
    %c0_6 = arith.constant 0 : index
    %c0_7 = arith.constant 0 : index
    %16 = vector.load %arg4[%c0_6, %c0_7] : memref<4x128xf32, #tpu.memory_space<vmem>>, vector<4x128xf32>
    tpu.vector_store %arg4[%c0_6, %c0_7], %15 {strides = array<i32>} : memref<4x128xf32, #tpu.memory_space<vmem>>, vector<4x128xf32>,
    return
  }
  func.func @transform_0(%arg0: i32, %arg1: i32) -> (i32, i32) {
    %c0_i32 = arith.constant 0 : i32
    return %arg1, %arg0 : i32, i32
  }
  func.func @transform_1(%arg0: i32, %arg1: i32) -> (i32, i32) {
    %c0_i32 = arith.constant 0 : i32
    %c0_i32_0 = arith.constant 0 : i32
    return %c0_i32, %arg0 : i32, i32
  }
  func.func @transform_2(%arg0: i32, %arg1: i32) -> (i32, i32) {
    %c0_i32 = arith.constant 0 : i32
    return %arg1, %arg0 : i32, i32
  }
}

</mosaic_0001>

<llo_original>
// kernel: tpu_custom_call.1
$region0: #{tpu_custom_call.1}
  #allocation0 [shape = 'u32[]', space=smem, size = 0x4, offset = 0x4, fixed_abs, tag = 'smem constant byte address 0x4 - core index']
  #allocation1 [shape = 'u32[144,128]{1,0:T(1,128)}', space=vmem, size = 0x12000, scoped, tag = 'internal scratch']
  %s0 = inlined_call_operand.hbm [shape: f32[4,128], index: 0, kind: input, shape index: {}]
  %s1 = inlined_call_operand.vmem [shape: f32[1,128], index: 1, kind: input, shape index: {}]
  %s2 = inlined_call_operand.hbm [shape: f32[4,128], index: 2, kind: output, shape index: {}]
  %s3 = sld [smem:[#allocation0]]
  $region22: #{tpu_custom_call.1} parent=0
    _
  %s5 = ssub.s32 1, %s3
  %s6 = scalar_select 0, %s5, %s3
  $region1: #{tpu_custom_call.1} parent=0
    #allocation2 [shape = 'u8[2048]{0}', space=vmem, size = 0x800, scoped, tag = 'input window, operand 0, single buffered']
    #allocation3 [shape = 's32[1]{0}', space=sflag, size = 0x4, scoped, tag = 'scoped memory for tpu_custom_call.1']
    #allocation4 [shape = 's32[1]{0}', space=sflag, size = 0x4, scoped, tag = 'scoped memory for tpu_custom_call.1']
    #allocation5 [shape = 'u8[2048]{0}', space=vmem, size = 0x800, scoped, tag = 'output window, operand 0, single buffered']
    %7 = vsyncpa [#allocation3], 0
    %8 = vsyncpa [#allocation4], 0
    // Predicated region
    $region2: #{tpu_custom_call.1} parent=1 // pred_check
      _
    $region3: #{tpu_custom_call.1} parent=1 // pred_check_branch
      %10 = sbr.rel (0) target = $region5
    $region4: #{tpu_custom_call.1} parent=1 // pred_region
      %s12 = ssub.s32 64, 64
      %13 = vsyncadd [#allocation3], %s12
      %s15 = sshll.u32 [#allocation2], 4
      %s16 = int_to_ptr.vmem [resolvable:$true] %s15
      %18 = dma.hbm_to_vmem [thread:$0]  %s0, 64, %s16, [#allocation3]
    $region5: #{tpu_custom_call.1} parent=1 // pred_fallthru
      _
    // Predicated region
    $region6: #{tpu_custom_call.1} parent=1 // pred_check
      _
    $region7: #{tpu_custom_call.1} parent=1 // pred_check_branch
      %20 = sbr.rel (0) target = $region9
    $region8: #{tpu_custom_call.1} parent=1 // pred_region
      _
    $region9: #{tpu_custom_call.1} parent=1 // pred_fallthru
      _
    // Predicated region
    $region10: #{tpu_custom_call.1} parent=1 // pred_check
      _
    $region11: #{tpu_custom_call.1} parent=1 // pred_check_branch
      %22 = sbr.rel (0) target = $region13
    $region12: #{tpu_custom_call.1} parent=1 // pred_region
      %23 = dma.done [#allocation3], 64
    $region13: #{tpu_custom_call.1} parent=1 // pred_fallthru
      _
    %v24 = vld [vmem:[#allocation2] sm:$0xf]
    %v25 = vld [vmem:[%s1] sm:$0x1]
    %v27 = vlaneseq
    %v28 = vshrl.u32 %v27, 7
    %v29 = vsub.s32 0, %v28
    %v30 = vrot.slane %v25, %v29
    %v32 = vadd.f32 %v24, %v30
    %v33 = vmul.f32 %v32, %v32
    %v34 = vmul.f32 %v33, 0.035677407
    %v35 = vadd.f32 %v34, 0.7978846
    %v36 = vmul.f32 %v32, %v35
    %v37 = vtanh.pop %v36
    %v38 = vmul.f32 %v37, 0.5
    %v39 = vadd.f32 %v38, 0.5
    %v40 = vmul.f32 %v32, %v39
    %41 = vst [vmem:[#allocation5] sm:$0xf] %v40
    // Predicated region
    $region14: #{tpu_custom_call.1} parent=1 // pred_check
      _
    $region15: #{tpu_custom_call.1} parent=1 // pred_check_branch
      %43 = sbr.rel (0) target = $region17
    $region16: #{tpu_custom_call.1} parent=1 // pred_region
      %s45 = ssub.s32 64, 64
      %46 = vsyncadd [#allocation4], %s45
      %s48 = sshll.u32 [#allocation5], 4
      %s49 = int_to_ptr.vmem [resolvable:$true] %s48
      %51 = dma.vmem_to_hbm [thread:$0]  %s49, 64, %s2, [#allocation4]
    $region17: #{tpu_custom_call.1} parent=1 // pred_fallthru
      _
    // Predicated region
    $region18: #{tpu_custom_call.1} parent=1 // pred_check
      _
    $region19: #{tpu_custom_call.1} parent=1 // pred_check_branch
      %53 = sbr.rel (0) target = $region21
    $region20: #{tpu_custom_call.1} parent=1 // pred_region
      %54 = dma.done [#allocation4], 64
    $region21: #{tpu_custom_call.1} parent=1 // pred_fallthru
      _
    %55 = vsyncpa [#allocation3], 1
    %56 = vsyncpa [#allocation4], 1

</llo_original>
